<compile_context>
chip_gen: v6e
topology: v6e:2x2x1
jax: 0.10.0
libtpu: 0.0.40
codegen_flags: <defaults>
</compile_context>

<pallas_src>
import functools
import math

import jax
import jax.numpy as jnp
from jax import lax
from jax.experimental import pallas as pl
from jax.experimental.pallas import tpu as pltpu


# ------------------------------ tiling helpers ------------------------------

def _pick_k_tile(l_k):
    """Key-dimension tile for Kernel A (multiple of 128, or the full extent)."""
    for t in (512, 256, 128):
        if l_k % t == 0:
            return t
    return l_k


def _pick_cum_tile(l_v):
    """Chunk size for the blocked causal cumsum (largest divisor <= 256, mult of 8)."""
    best = None
    for t in range(8, min(l_v, 256) + 1, 8):
        if l_v % t == 0:
            best = t
    return best or l_v


def _choose_head_block(H, L_Q, L_K, TK, D, u, budget_bytes=24 << 20):
    """Heads per grid step: largest divisor of H that keeps a rough VMEM estimate
    under budget.  Hb == H or Hb % 8 == 0 keeps the (1, L_Q, Hb, D) output block
    and the (1, Hb, L_Q) M block legal."""
    cands = [h for h in range(H, 0, -1)
             if H % h == 0 and (h == H or h % 8 == 0)]
    for hb in cands:
        est = (
            2 * 2 * 2 * hb * (L_Q + TK + 2 * L_K) * D   # double-buffered bf16 Q/K/V blocks
            + 3 * hb * L_Q * TK * 4                     # Kernel-A (Hb, L_Q, TK) f32 intermediates
            + hb * L_Q * (D + 1) * 4                    # Kernel-A accumulators
            + hb * (3 * u * L_K + 2 * L_Q * D) * 4      # Kernel-B intermediates
            + 2 * hb * L_Q * D * 4                      # f32 output block, double-buffered
        )
        if est <= budget_bytes:
            return hb
    return cands[-1]


# ------------------------------ Kernel A: sparsity measure M ----------------

def _prob_m_kernel(q_ref, k_ref, scount_ref, m_ref, mmax_ref, ks_ref, *, inv_l_k):
    """Per (b, head-block): running max over sampled scores + running scount @ K."""
    kt = pl.program_id(2)

    @pl.when(kt == 0)
    def _init():
        mmax_ref[...] = jnp.full(mmax_ref.shape, -jnp.inf, mmax_ref.dtype)
        ks_ref[...] = jnp.zeros(ks_ref.shape, ks_ref.dtype)

    q = q_ref[0]                      # (Hb, L_Q, D)  bf16
    k = k_ref[0]                      # (Hb, TK, D)   bf16
    sc = scount_ref[...]              # (L_Q, TK)     bf16 sample multiplicities

    # Sampled scores for the running max (bf16 MXU, f32 accumulation).
    s = jnp.einsum('hqd,hkd->hqk', q, k,
                   preferred_element_type=jnp.float32)             # (Hb, L_Q, TK)
    s_masked = jnp.where((sc > 0.0)[None], s, -jnp.inf)
    mmax_ref[...] = jnp.maximum(mmax_ref[...], jnp.max(s_masked, axis=-1))

    # MXU form of sum_k scount[q, k] * s[h, q, k]:
    # accumulate (scount @ K) per head, contract against Q once at the end.
    hb = q.shape[0]
    for h in range(hb):               # Hb is small and static
        ks_ref[h] += jnp.dot(sc, k[h], preferred_element_type=jnp.float32)

    @pl.when(kt == pl.num_programs(2) - 1)
    def _finalize():
        m_sum = jnp.sum(q.astype(jnp.float32) * ks_ref[...], axis=-1)   # (Hb, L_Q)
        m_ref[0] = mmax_ref[...] - m_sum * inv_l_k


# ------------------------------ Kernel B: top-u attention + context ---------

def _prob_attn_kernel(idx_ref, q_ref, k_ref, v_ref, out_ref, *,
                      scale, mask_flag, cum_tile):
    q = q_ref[0]              # (Hb, L_Q, D) bf16
    k = k_ref[0]              # (Hb, L_K, D) bf16
    v = v_ref[0]              # (Hb, L_V, D) bf16
    idx = idx_ref[0]          # (Hb, u, 1)   int32 top-u query positions

    hb, l_q, d = q.shape
    l_k = k.shape[1]
    l_v = v.shape[1]
    u = idx.shape[1]

    # Q_reduce = Q[idx] via one-hot matmul (no dynamic row gather on TPU).
    colq = lax.broadcasted_iota(jnp.int32, (hb, u, l_q), 2)
    sel = colq == idx                                                 # (Hb, u, L_Q)
    sel_f = sel.astype(jnp.float32)
    q_red = jnp.einsum('htq,hqd->htd', sel.astype(jnp.bfloat16), q,
                       preferred_element_type=jnp.float32)            # (Hb, u, D)

    scores = jnp.einsum('htd,hkd->htk', q_red.astype(jnp.bfloat16), k,
                        preferred_element_type=jnp.float32) * scale   # (Hb, u, L_K)

    if mask_flag:
        # ProbMask: mask[t, j] = j > index[t]
        colk = lax.broadcasted_iota(jnp.int32, (hb, u, l_k), 2)
        scores = jnp.where(colk > idx, -jnp.inf, scores)

    mx = jnp.max(scores, axis=-1, keepdims=True)
    p = jnp.exp(scores - mx)
    attn = p * pl.reciprocal(jnp.sum(p, axis=-1, keepdims=True), approx=True)
    av = jnp.einsum('htk,hkd->htd', attn.astype(jnp.bfloat16), v,
                    preferred_element_type=jnp.float32)               # (Hb, u, D)

    # Initial context.
    if mask_flag:
        # cumsum(V) along the sequence as a blocked prefix sum:
        # small (t, t) triangular matmuls + running (Hb, 1, D) carry.
        t = cum_tile
        row = lax.broadcasted_iota(jnp.int32, (t, t), 0)
        col = lax.broadcasted_iota(jnp.int32, (t, t), 1)
        lower = jnp.broadcast_to((col <= row).astype(jnp.bfloat16)[None], (hb, t, t))
        carry = jnp.zeros((hb, 1, d), jnp.float32)
        chunks = []
        for c in range(l_v // t):
            v_c = v[:, c * t:(c + 1) * t, :]
            chunks.append(jnp.einsum('hts,hsd->htd', lower, v_c,
                                     preferred_element_type=jnp.float32) + carry)
            carry = carry + jnp.sum(v_c.astype(jnp.float32), axis=1, keepdims=True)
        ctx = chunks[0] if len(chunks) == 1 else jnp.concatenate(chunks, axis=1)
    else:
        mean = jnp.mean(v.astype(jnp.float32), axis=1, keepdims=True)
        ctx = jnp.broadcast_to(mean, (hb, l_q, d))

    # Scatter: context[idx] = attn @ V  (top-k indices are unique -> exact assign).
    row_hit = jnp.sum(sel_f, axis=1)[:, :, None]                      # (Hb, L_Q, 1)
    scatter = jnp.einsum('htq,htd->hqd', sel_f, av,
                         preferred_element_type=jnp.float32)          # (Hb, L_Q, D)
    ctx = ctx * (1.0 - row_hit) + scatter

    # Store directly in (B, L_Q, H, D) layout (no wrapper-side transpose).
    out_ref[0] = pltpu.einshape('hqd->qhd', ctx).astype(out_ref.dtype)


# ------------------------------ wrapper --------------------------------------

def prob_attention_forward(queries, keys, values, index_sample, *,
                           factor=5, scale=True, mask_flag=True):
    """Mirrors ProbAttention.forward(queries, keys, values, mask, dropout).

    scale follows the reference exactly: `self.scale or 1/sqrt(D)` -> scale=True
    multiplies by 1.0; pass scale=None/False to get 1/sqrt(D).
    output_attention=False -> second return value is None; dropout is never applied
    in the reference forward, so it is not applied here.
    """
    B, H, L_Q, D = queries.shape
    _, _, L_K, _ = keys.shape
    L_V = values.shape[2]

    U_part = min(factor * int(math.ceil(math.log(L_K))), L_K)
    u = min(factor * int(math.ceil(math.log(L_Q))), L_Q)
    assert index_sample.shape == (L_Q, U_part)
    if mask_flag:
        assert L_Q == L_V

    # bf16 MXU inputs (f32 accumulation stays inside the kernels).
    q_bf = queries.astype(jnp.bfloat16)
    k_bf = keys.astype(jnp.bfloat16)
    v_bf = values.astype(jnp.bfloat16)

    # Sample multiplicity per (query, key); shared across (B, H) like the reference's
    # single torch.randint draw.  bf16 is exact for counts <= U_part < 256.
    scount = (jnp.zeros((L_Q, L_K), jnp.float32)
              .at[jnp.arange(L_Q)[:, None], index_sample].add(1.0)
              ).astype(jnp.bfloat16)

    TK = _pick_k_tile(L_K)
    Hb = _choose_head_block(H, L_Q, L_K, TK, D, u)
    cum_tile = _pick_cum_tile(L_V)

    # ---- Kernel A: sparsity measure M --------------------------------------
    m = pl.pallas_call(
        functools.partial(_prob_m_kernel, inv_l_k=1.0 / float(L_K)),
        out_shape=jax.ShapeDtypeStruct((B, H, L_Q), jnp.float32),
        grid=(B, H // Hb, L_K // TK),
        in_specs=[
            pl.BlockSpec((1, Hb, L_Q, D), lambda b, h, kt: (b, h, 0, 0)),
            pl.BlockSpec((1, Hb, TK, D), lambda b, h, kt: (b, h, kt, 0)),
            pl.BlockSpec((L_Q, TK), lambda b, h, kt: (0, kt)),
        ],
        out_specs=pl.BlockSpec((1, Hb, L_Q), lambda b, h, kt: (b, h, 0)),
        scratch_shapes=[pltpu.VMEM((Hb, L_Q), jnp.float32),
                        pltpu.VMEM((Hb, L_Q, D), jnp.float32)],
        compiler_params=pltpu.CompilerParams(
            dimension_semantics=("parallel", "parallel", "arbitrary")),
    )(q_bf, k_bf, scount)

    # top-u query indices per (b, h); torch .topk(sorted=False) selects the same set.
    # TODO(synk): no clean Pallas TPU top-k primitive; jax.lax.top_k used in glue.
    index = lax.top_k(m, u)[1].astype(jnp.int32)                      # (B, H, u)
    idx_v = index[..., None]                                          # (B, H, u, 1)

    scale_val = float(scale) if scale else 1.0 / math.sqrt(D)

    # ---- Kernel B: masked softmax on top-u queries + context update --------
    context = pl.pallas_call(
        functools.partial(_prob_attn_kernel, scale=scale_val,
                          mask_flag=mask_flag, cum_tile=cum_tile),
        out_shape=jax.ShapeDtypeStruct((B, L_Q, H, D), jnp.float32),
        grid=(B, H // Hb),
        in_specs=[
            pl.BlockSpec((1, Hb, u, 1), lambda b, h: (b, h, 0, 0)),
            pl.BlockSpec((1, Hb, L_Q, D), lambda b, h: (b, h, 0, 0)),
            pl.BlockSpec((1, Hb, L_K, D), lambda b, h: (b, h, 0, 0)),
            pl.BlockSpec((1, Hb, L_V, D), lambda b, h: (b, h, 0, 0)),
        ],
        out_specs=pl.BlockSpec((1, L_Q, Hb, D), lambda b, h: (b, 0, h, 0)),
        compiler_params=pltpu.CompilerParams(
            dimension_semantics=("parallel", "parallel")),
    )(idx_v, q_bf, k_bf, v_bf)

    # Already in (B, L_Q, H, D); output_attention=False -> None.
    return context, None


if __name__ == "__main__":
    key = jax.random.PRNGKey(0)
    B, H, L, D = 2, 2, 64, 32
    factor = 5

    kq, kk, kv, ks = jax.random.split(key, 4)
    queries = jax.random.normal(kq, (B, H, L, D), jnp.float32)
    keys_ = jax.random.normal(kk, (B, H, L, D), jnp.float32)
    values = jax.random.normal(kv, (B, H, L, D), jnp.float32)

    # torch.randint(L_K, (L_Q, sample_k)) equivalent, deterministic.
    U_part = min(factor * int(math.ceil(math.log(L))), L)
    index_sample = jax.random.randint(ks, (L, U_part), 0, L, dtype=jnp.int32)

    context, attn = prob_attention_forward(
        queries, keys_, values, index_sample,
        factor=factor, scale=True, mask_flag=True)
    context = jax.block_until_ready(context)

    assert context.shape == (B, L, H, D)
    assert bool(jnp.all(jnp.isfinite(context)))
    assert attn is None
    print("KERNEL_OK")
</pallas_src>

<mosaic_0001>
module attributes {stable_mosaic.version = 11 : i64} {
  func.func @_prob_m_kernel(%arg0: i32, %arg1: i32, %arg2: i32, %arg3: memref<1x2x64x32xbf16, #tpu.memory_space<vmem>>, %arg4: memref<1x2x64x32xbf16, #tpu.memory_space<vmem>>, %arg5: memref<64x64xbf16, #tpu.memory_space<vmem>>, %arg6: memref<1x2x64xf32, #tpu.memory_space<vmem>>, %arg7: memref<2x64xf32, #tpu.memory_space<vmem>>, %arg8: memref<2x64x32xf32, #tpu.memory_space<vmem>>) attributes {dimension_semantics = [#tpu.dimension_semantics<parallel>, #tpu.dimension_semantics<parallel>, #tpu.dimension_semantics<arbitrary>], iteration_bounds = array<i64: 2, 1, 1>, scalar_prefetch = 0 : i64, scratch_operands = 2 : i64, tpu.core_type = #tpu.core_type<tc>, window_params = [{transform_indices = @transform_0, window_bounds = array<i64: 1, 2, 64, 32>}, {transform_indices = @transform_1, window_bounds = array<i64: 1, 2, 64, 32>}, {transform_indices = @transform_2, window_bounds = array<i64: 64, 64>}, {transform_indices = @transform_3, window_bounds = array<i64: 1, 2, 64>}]} {
    %c0_i32 = arith.constant 0 : i32
    %0 = arith.cmpi eq, %arg2, %c0_i32 : i32
    %1 = arith.extui %0 : i1 to i32
    %c0_i32_0 = arith.constant 0 : i32
    %2 = arith.cmpi ne, %1, %c0_i32_0 : i32
    scf.if %2 {
      %cst_32 = arith.constant 0xFF800000 : f32
      %41 = vector.broadcast %cst_32 : f32 to vector<2x64xf32>
      %c0_33 = arith.constant 0 : index
      %c0_34 = arith.constant 0 : index
      %42 = vector.load %arg7[%c0_33, %c0_34] : memref<2x64xf32, #tpu.memory_space<vmem>>, vector<2x64xf32>
      tpu.vector_store %arg7[%c0_33, %c0_34], %41 {strides = array<i32>} : memref<2x64xf32, #tpu.memory_space<vmem>>, vector<2x64xf32>,
      %cst_35 = arith.constant 0.000000e+00 : f32
      %43 = vector.broadcast %cst_35 : f32 to vector<2x64x32xf32>
      %c0_36 = arith.constant 0 : index
      %c0_37 = arith.constant 0 : index
      %c0_38 = arith.constant 0 : index
      %44 = vector.load %arg8[%c0_36, %c0_37, %c0_38] : memref<2x64x32xf32, #tpu.memory_space<vmem>>, vector<2x64x32xf32>
      tpu.vector_store %arg8[%c0_36, %c0_37, %c0_38], %43 {strides = array<i32>} : memref<2x64x32xf32, #tpu.memory_space<vmem>>, vector<2x64x32xf32>,
    } else {
    }
    %c0 = arith.constant 0 : index
    %c0_1 = arith.constant 0 : index
    %c0_2 = arith.constant 0 : index
    %c0_3 = arith.constant 0 : index
    %3 = vector.load %arg3[%c0, %c0_1, %c0_2, %c0_3] : memref<1x2x64x32xbf16, #tpu.memory_space<vmem>>, vector<1x2x64x32xbf16>
    %4 = vector.shape_cast %3 : vector<1x2x64x32xbf16> to vector<2x64x32xbf16>
    %c0_4 = arith.constant 0 : index
    %c0_5 = arith.constant 0 : index
    %c0_6 = arith.constant 0 : index
    %c0_7 = arith.constant 0 : index
    %5 = vector.load %arg4[%c0_4, %c0_5, %c0_6, %c0_7] : memref<1x2x64x32xbf16, #tpu.memory_space<vmem>>, vector<1x2x64x32xbf16>
    %6 = vector.shape_cast %5 : vector<1x2x64x32xbf16> to vector<2x64x32xbf16>
    %c0_8 = arith.constant 0 : index
    %c0_9 = arith.constant 0 : index
    %7 = vector.load %arg5[%c0_8, %c0_9] : memref<64x64xbf16, #tpu.memory_space<vmem>>, vector<64x64xbf16>
    "tpu.trace_start"() <{level = 10 : i32, message = "hqd,hkd->hqk"}> : () -> ()
    %cst = arith.constant dense<0.000000e+00> : vector<2x64x64xf32>
    %8 = tpu.matmul %4, %6, %cst {dimension_numbers = #tpu.dot_dimension_numbers<[2], [2], [1], [1], [0, 0, 0, 1, 1, 1], [0], [0]>} : vector<2x64x32xbf16>, vector<2x64x32xbf16>, vector<2x64x64xf32> -> vector<2x64x64xf32>
    %cst_10 = arith.constant 0.000000e+00 : bf16
    "tpu.trace_stop"() : () -> ()
    %9 = vector.broadcast %cst_10 : bf16 to vector<64x64xbf16>
    %10 = arith.cmpf ogt, %7, %9 : vector<64x64xbf16>
    %11 = vector.shape_cast %10 : vector<64x64xi1> to vector<1x64x64xi1>
    %cst_11 = arith.constant 0xFF800000 : f32
    %12 = vector.shape_cast %11 : vector<1x64x64xi1> to vector<1x64x64xi1>
    %13 = vector.broadcast %12 : vector<1x64x64xi1> to vector<2x64x64xi1>
    %14 = vector.broadcast %cst_11 : f32 to vector<2x64x64xf32>
    %15 = arith.select %13, %8, %14 : vector<2x64x64xi1>, vector<2x64x64xf32>
    %c0_12 = arith.constant 0 : index
    %c0_13 = arith.constant 0 : index
    %16 = vector.load %arg7[%c0_12, %c0_13] : memref<2x64xf32, #tpu.memory_space<vmem>>, vector<2x64xf32>
    %cst_14 = arith.constant dense<0xFF800000> : vector<2x64xf32>
    %17 = vector.multi_reduction <maximumf>, %15, %cst_14 [2] : vector<2x64x64xf32> to vector<2x64xf32>
    %18 = arith.maximumf %16, %17 : vector<2x64xf32>
    %c0_15 = arith.constant 0 : index
    %c0_16 = arith.constant 0 : index
    %19 = vector.load %arg7[%c0_15, %c0_16] : memref<2x64xf32, #tpu.memory_space<vmem>>, vector<2x64xf32>
    tpu.vector_store %arg7[%c0_15, %c0_16], %18 {strides = array<i32>} : memref<2x64xf32, #tpu.memory_space<vmem>>, vector<2x64xf32>,
    %c0_17 = arith.constant 0 : index
    %c0_18 = arith.constant 0 : index
    %c0_19 = arith.constant 0 : index
    %20 = vector.load %arg8[%c0_17, %c0_18, %c0_19] : memref<2x64x32xf32, #tpu.memory_space<vmem>>, vector<1x64x32xf32>
    %21 = vector.shape_cast %20 : vector<1x64x32xf32> to vector<64x32xf32>
    %22 = vector.extract_strided_slice %6 {offsets = [0, 0, 0], sizes = [1, 64, 32], strides = [1, 1, 1]} : vector<2x64x32xbf16> to vector<1x64x32xbf16>
    %23 = vector.shape_cast %22 : vector<1x64x32xbf16> to vector<64x32xbf16>
    %cst_20 = arith.constant dense<0.000000e+00> : vector<64x32xf32>
    %24 = tpu.matmul %7, %23, %cst_20 {dimension_numbers = #tpu.dot_dimension_numbers<[1], [0], [0], [1], [0, 0, 1, 1], [], []>} : vector<64x64xbf16>, vector<64x32xbf16>, vector<64x32xf32> -> vector<64x32xf32>
    %25 = arith.addf %21, %24 : vector<64x32xf32>
    %c0_21 = arith.constant 0 : index
    %c0_22 = arith.constant 0 : index
    %c0_23 = arith.constant 0 : index
    %26 = vector.load %arg8[%c0_21, %c0_22, %c0_23] : memref<2x64x32xf32, #tpu.memory_space<vmem>>, vector<1x64x32xf32>
    %27 = vector.shape_cast %26 : vector<1x64x32xf32> to vector<64x32xf32>
    %28 = vector.shape_cast %25 : vector<64x32xf32> to vector<1x64x32xf32>
    tpu.vector_store %arg8[%c0_21, %c0_22, %c0_23], %28 {strides = array<i32>} : memref<2x64x32xf32, #tpu.memory_space<vmem>>, vector<1x64x32xf32>,
    %c1 = arith.constant 1 : index
    %c0_24 = arith.constant 0 : index
    %c0_25 = arith.constant 0 : index
    %29 = vector.load %arg8[%c1, %c0_24, %c0_25] : memref<2x64x32xf32, #tpu.memory_space<vmem>>, vector<1x64x32xf32>
    %30 = vector.shape_cast %29 : vector<1x64x32xf32> to vector<64x32xf32>
    %31 = vector.extract_strided_slice %6 {offsets = [1, 0, 0], sizes = [1, 64, 32], strides = [1, 1, 1]} : vector<2x64x32xbf16> to vector<1x64x32xbf16>
    %32 = vector.shape_cast %31 : vector<1x64x32xbf16> to vector<64x32xbf16>
    %cst_26 = arith.constant dense<0.000000e+00> : vector<64x32xf32>
    %33 = tpu.matmul %7, %32, %cst_26 {dimension_numbers = #tpu.dot_dimension_numbers<[1], [0], [0], [1], [0, 0, 1, 1], [], []>} : vector<64x64xbf16>, vector<64x32xbf16>, vector<64x32xf32> -> vector<64x32xf32>
    %34 = arith.addf %30, %33 : vector<64x32xf32>
    %c1_27 = arith.constant 1 : index
    %c0_28 = arith.constant 0 : index
    %c0_29 = arith.constant 0 : index
    %35 = vector.load %arg8[%c1_27, %c0_28, %c0_29] : memref<2x64x32xf32, #tpu.memory_space<vmem>>, vector<1x64x32xf32>
    %36 = vector.shape_cast %35 : vector<1x64x32xf32> to vector<64x32xf32>
    %37 = vector.shape_cast %34 : vector<64x32xf32> to vector<1x64x32xf32>
    tpu.vector_store %arg8[%c1_27, %c0_28, %c0_29], %37 {strides = array<i32>} : memref<2x64x32xf32, #tpu.memory_space<vmem>>, vector<1x64x32xf32>,
    %c0_i32_30 = arith.constant 0 : i32
    %38 = arith.cmpi eq, %arg2, %c0_i32_30 : i32
    %39 = arith.extui %38 : i1 to i32
    %c0_i32_31 = arith.constant 0 : i32
    %40 = arith.cmpi ne, %39, %c0_i32_31 : i32
    scf.if %40 {
      %41 = arith.extf %4 : vector<2x64x32xbf16> to vector<2x64x32xf32>
      %c0_32 = arith.constant 0 : index
      %c0_33 = arith.constant 0 : index
      %c0_34 = arith.constant 0 : index
      %42 = vector.load %arg8[%c0_32, %c0_33, %c0_34] : memref<2x64x32xf32, #tpu.memory_space<vmem>>, vector<2x64x32xf32>
      %43 = arith.mulf %41, %42 : vector<2x64x32xf32>
      %cst_35 = arith.constant dense<0.000000e+00> : vector<2x64xf32>
      %44 = vector.multi_reduction <add>, %43, %cst_35 [2] : vector<2x64x32xf32> to vector<2x64xf32>
      %c0_36 = arith.constant 0 : index
      %c0_37 = arith.constant 0 : index
      %45 = vector.load %arg7[%c0_36, %c0_37] : memref<2x64xf32, #tpu.memory_space<vmem>>, vector<2x64xf32>
      %cst_38 = arith.constant 1.562500e-02 : f32
      %46 = vector.broadcast %cst_38 : f32 to vector<2x64xf32>
      %47 = arith.mulf %44, %46 : vector<2x64xf32>
      %48 = arith.subf %45, %47 : vector<2x64xf32>
      %c0_39 = arith.constant 0 : index
      %c0_40 = arith.constant 0 : index
      %c0_41 = arith.constant 0 : index
      %49 = vector.load %arg6[%c0_39, %c0_40, %c0_41] : memref<1x2x64xf32, #tpu.memory_space<vmem>>, vector<1x2x64xf32>
      %50 = vector.shape_cast %49 : vector<1x2x64xf32> to vector<2x64xf32>
      %51 = vector.shape_cast %48 : vector<2x64xf32> to vector<1x2x64xf32>
      tpu.vector_store %arg6[%c0_39, %c0_40, %c0_41], %51 {strides = array<i32>} : memref<1x2x64xf32, #tpu.memory_space<vmem>>, vector<1x2x64xf32>,
    } else {
    }
    return
  }
  func.func @transform_0(%arg0: i32, %arg1: i32, %arg2: i32) -> (i32, i32, i32, i32) {
    %c0_i32 = arith.constant 0 : i32
    %c0_i32_0 = arith.constant 0 : i32
    %c0_i32_1 = arith.constant 0 : i32
    return %arg0, %arg1, %c0_i32, %c0_i32_0 : i32, i32, i32, i32
  }
  func.func @transform_1(%arg0: i32, %arg1: i32, %arg2: i32) -> (i32, i32, i32, i32) {
    %c0_i32 = arith.constant 0 : i32
    %c0_i32_0 = arith.constant 0 : i32
    return %arg0, %arg1, %arg2, %c0_i32 : i32, i32, i32, i32
  }
  func.func @transform_2(%arg0: i32, %arg1: i32, %arg2: i32) -> (i32, i32) {
    %c0_i32 = arith.constant 0 : i32
    %c0_i32_0 = arith.constant 0 : i32
    return %c0_i32, %arg2 : i32, i32
  }
  func.func @transform_3(%arg0: i32, %arg1: i32, %arg2: i32) -> (i32, i32, i32) {
    %c0_i32 = arith.constant 0 : i32
    %c0_i32_0 = arith.constant 0 : i32
    return %arg0, %arg1, %c0_i32 : i32, i32, i32
  }
}

</mosaic_0001>

<llo_original>
// kernel: tpu_custom_call.1
$region0: #{tpu_custom_call.1}
  #allocation0 [shape = 'u32[]', space=smem, size = 0x4, offset = 0x4, fixed_abs, tag = 'smem constant byte address 0x4 - core index']
  #allocation1 [shape = 'u32[144,128]{1,0:T(1,128)}', space=vmem, size = 0x12000, scoped, tag = 'internal scratch']
  #allocation2 [shape = 'f32[2,64]{1,0:T(2,128)}', space=vmem, size = 0x400, scoped, tag = 'scratch operand']
  #allocation3 [shape = 'f32[2,64,32]{2,1,0:T(8,128)}', space=vmem, size = 0x10000, scoped, tag = 'scratch operand']
  %s0 = inlined_call_operand.vmem [shape: bf16[2,2,64,32], index: 0, kind: input, shape index: {}]
  %s1 = inlined_call_operand.vmem [shape: bf16[2,2,64,32], index: 1, kind: input, shape index: {}]
  %s2 = inlined_call_operand.vmem [shape: bf16[64,64], index: 2, kind: input, shape index: {}]
  %s3 = inlined_call_operand.hbm [shape: f32[2,2,64], index: 3, kind: output, shape index: {}]
  %s4 = sld [smem:[#allocation0]]
  $region53: #{tpu_custom_call.1} parent=0
    _
  %s6 = ssub.s32 1, %s4
  %s7 = scalar_select 0, %s6, %s4
  $region1: #{tpu_custom_call.1} parent=0
    #allocation4 [shape = 'u8[2048]{0}', space=vmem, size = 0x800, scoped, tag = 'output window, operand 0']
    #allocation5 [shape = 's32[2]{0}', space=sflag, size = 0x8, scoped, tag = 'scoped memory for tpu_custom_call.1']
    %8 = vsyncpa [#allocation5], 0
    %s9 = scalar_lea.sflag [#allocation5], 1
    %10 = vsyncpa %s9, 0
    loop: start=0, step=1, limit=4
    $region2: #{tpu_custom_call.1} parent=1 // loop_pre_header
      _
    $region3: #{tpu_custom_call.1} parent=1 // loop_header
      %s12 = sphi 0, %s16
      %p13 = scmp.ge.s32.totalorder %s12, 4
      %s19 = sphi 0, %s38
      %s20 = sphi 0, %s34
      %s21 = sphi 0, %s30
      %s22 = sphi 0, %s19
      %s23 = sphi 0, %s20
      %s24 = sphi 0, %s21
      %s25 = sphi 0, %s22
      %s26 = sphi 0, %s23
      %s27 = sphi 0, %s24
      %s43 = sphi 0, %s45
      %s46 = sphi 0, %s43
      %s47 = sphi 0, %s46
      %s63 = sphi 0, %s47
      %s73 = sphi 0, %s75
      %s76 = sphi 0, %s73
      %s77 = sphi 0, %s76
      %s93 = sphi 0, %s77
      %s99 = sphi 0, %s101
      %s102 = sphi 0, %s99
      %s103 = sphi 0, %s102
      %s119 = sphi 0, %s103
      %s127 = sphi 0, %s129
      %s130 = sphi 0, %s127
      %s131 = sphi 0, %s130
      %s147 = sphi 0, %s131
    $region4: #{tpu_custom_call.1} parent=1 // loop_header_branch
      %15 = sbr.rel (%p13) target = $region8
    $region5: #{tpu_custom_call.1} parent=1 // loop_body
      %s17 = ssub.s32 %s12, 1
      %s18 = ssub.s32 %s12, 2
      %s28 = sadd.s32 1, %s21
      %p29 = scmp.ge.s32.totalorder %s28, 1
      %s30 = scalar_select %p29, 0, %s28
      %s31 = sadd.s32 1, %s20
      %s32 = scalar_select %p29, %s31, %s20
      %p33 = scmp.ge.s32.totalorder %s32, 1
      %s34 = scalar_select %p33, 0, %s32
      %s35 = sadd.s32 1, %s19
      %s36 = scalar_select %p33, %s35, %s19
      %p37 = scmp.ge.s32.totalorder %s36, 2
      %s38 = scalar_select %p37, 0, %s36
      %s39 = ssub.s32 %s19, %s38
      %s40 = ssub.s32 %s20, %s34
      %s41 = sor.u32 %s39, %s40
      %p42 = scmp.eq.s32.totalorder %s41, 0
      %s44 = sadd.s32 %s43, 1
      %s45 = scalar_select %p42, %s43, %s44
      %p48 = pneg %p42
      %p49 = scmp.eq.s32.totalorder %s12, 1
      %p50 = por %p48, %p49
      %p51 = scmp.ne.s32.totalorder %s43, %s46
      %p52 = scmp.eq.s32.totalorder %s12, 0
      %p53 = por %p51, %p52
      %p54 = scmp.ne.s32.totalorder %s43, %s46
      %p55 = scmp.eq.s32.totalorder %s17, 1
      %p56 = por %p54, %p55
      %p57 = scmp.ne.s32.totalorder %s46, %s47
      %p58 = scmp.eq.s32.totalorder %s17, 0
      %p59 = por %p57, %p58
      %p60 = scmp.ne.s32.totalorder %s46, %s47
      %p61 = scmp.eq.s32.totalorder %s18, 1
      %p62 = por %p60, %p61
      %p64 = scmp.ne.s32.totalorder %s47, %s63
      %p65 = scmp.eq.s32.totalorder %s18, 0
      %p66 = por %p64, %p65
      %s67 = ssub.s32 %s19, %s38
      %s68 = ssub.s32 %s20, %s34
      %s69 = sor.u32 %s67, %s68
      %s70 = ssub.s32 %s21, %s30
      %s71 = sor.u32 %s69, %s70
      %p72 = scmp.eq.s32.totalorder %s71, 0
      %s74 = sadd.s32 %s73, 1
      %s75 = scalar_select %p72, %s73, %s74
      %p78 = pneg %p72
      %p79 = scmp.eq.s32.totalorder %s12, 1
      %p80 = por %p78, %p79
      %p81 = scmp.ne.s32.totalorder %s73, %s76
      %p82 = scmp.eq.s32.totalorder %s12, 0
      %p83 = por %p81, %p82
      %p84 = scmp.ne.s32.totalorder %s73, %s76
      %p85 = scmp.eq.s32.totalorder %s17, 1
      %p86 = por %p84, %p85
      %p87 = scmp.ne.s32.totalorder %s76, %s77
      %p88 = scmp.eq.s32.totalorder %s17, 0
      %p89 = por %p87, %p88
      %p90 = scmp.ne.s32.totalorder %s76, %s77
      %p91 = scmp.eq.s32.totalorder %s18, 1
      %p92 = por %p90, %p91
      %p94 = scmp.ne.s32.totalorder %s77, %s93
      %p95 = scmp.eq.s32.totalorder %s18, 0
      %p96 = por %p94, %p95
      %s97 = ssub.s32 %s21, %s30
      %p98 = scmp.eq.s32.totalorder %s97, 0
      %s100 = sadd.s32 %s99, 1
      %s101 = scalar_select %p98, %s99, %s100
      %p104 = pneg %p98
      %p105 = scmp.eq.s32.totalorder %s12, 1
      %p106 = por %p104, %p105
      %p107 = scmp.ne.s32.totalorder %s99, %s102
      %p108 = scmp.eq.s32.totalorder %s12, 0
      %p109 = por %p107, %p108
      %p110 = scmp.ne.s32.totalorder %s99, %s102
      %p111 = scmp.eq.s32.totalorder %s17, 1
      %p112 = por %p110, %p111
      %p113 = scmp.ne.s32.totalorder %s102, %s103
      %p114 = scmp.eq.s32.totalorder %s17, 0
      %p115 = por %p113, %p114
      %p116 = scmp.ne.s32.totalorder %s102, %s103
      %p117 = scmp.eq.s32.totalorder %s18, 1
      %p118 = por %p116, %p117
      %p120 = scmp.ne.s32.totalorder %s103, %s119
      %p121 = scmp.eq.s32.totalorder %s18, 0
      %p122 = por %p120, %p121
      %s123 = ssub.s32 %s19, %s38
      %s124 = ssub.s32 %s20, %s34
      %s125 = sor.u32 %s123, %s124
      %p126 = scmp.eq.s32.totalorder %s125, 0
      %s128 = sadd.s32 %s127, 1
      %s129 = scalar_select %p126, %s127, %s128
      %p132 = pneg %p126
      %p133 = scmp.eq.s32.totalorder %s12, 1
      %p134 = por %p132, %p133
      %p135 = scmp.ne.s32.totalorder %s127, %s130
      %p136 = scmp.eq.s32.totalorder %s12, 0
      %p137 = por %p135, %p136
      %p138 = scmp.ne.s32.totalorder %s127, %s130
      %p139 = scmp.eq.s32.totalorder %s17, 1
      %p140 = por %p138, %p139
      %p141 = scmp.ne.s32.totalorder %s130, %s131
      %p142 = scmp.eq.s32.totalorder %s17, 0
      %p143 = por %p141, %p142
      %p144 = scmp.ne.s32.totalorder %s130, %s131
      %p145 = scmp.eq.s32.totalorder %s18, 1
      %p146 = por %p144, %p145
      %p148 = scmp.ne.s32.totalorder %s131, %s147
      %p149 = scmp.eq.s32.totalorder %s18, 0
      %p150 = por %p148, %p149
      %p151 = scmp.le.s32.totalorder 1, %s12
      %p152 = scmp.lt.s32.totalorder %s12, 3
      %p153 = pnand %p151, %p152
      %p154 = pneg %p153
      // Predicated region
      $region9: #{tpu_custom_call.1} parent=5 // pred_check
        _
      $region10: #{tpu_custom_call.1} parent=5 // pred_check_branch
        %156 = sbr.rel (%p153) target = $region12
      $region11: #{tpu_custom_call.1} parent=5 // pred_region
        %s157 = ssub.s32 %s12, 1
        // Predicated region
        $region13: #{tpu_custom_call.1} parent=11 // pred_check
          %p158 = pneg %p115
        $region14: #{tpu_custom_call.1} parent=11 // pred_check_branch
          %160 = sbr.rel (%p158) target = $region16
        $region15: #{tpu_custom_call.1} parent=11 // pred_region
          %p161 = scmp.lt.s32.totalorder %s24, 0
          %s162 = scalar_select %p161, %s24, 0
          %s163 = smul.addr %s162, 4
          %s164 = scalar_lea.vmem %s2, %s163
        $region16: #{tpu_custom_call.1} parent=11 // pred_fallthru
          _
      $region12: #{tpu_custom_call.1} parent=5 // pred_fallthru
        _
      %p165 = scmp.lt.s32.totalorder %s12, 2
      // Predicated region
      $region17: #{tpu_custom_call.1} parent=5 // pred_check
        %p166 = pneg %p165
      $region18: #{tpu_custom_call.1} parent=5 // pred_check_branch
        %168 = sbr.rel (%p166) target = $region20
      $region19: #{tpu_custom_call.1} parent=5 // pred_region
        // Predicated region
        $region21: #{tpu_custom_call.1} parent=19 // pred_check
          %p169 = pneg %p53
        $region22: #{tpu_custom_call.1} parent=19 // pred_check_branch
          %171 = sbr.rel (%p169) target = $region24
        $region23: #{tpu_custom_call.1} parent=19 // pred_region
          %s172 = smul.u32 2, %s20
          %p173 = scmp.lt.s32.totalorder %s19, 1
          %s174 = scalar_select %p173, %s19, 1
          %p175 = scmp.lt.s32.totalorder %s172, 1
          %s176 = scalar_select %p175, %s172, 1
          %s177 = smul.addr %s176, 8
          %s178 = smul.addr %s174, 16
          %s179 = sadd.s32 %s177, %s178
          %s180 = smul.addr %s179, 4
          %s181 = scalar_lea.vmem %s0, %s180
          %s182 = smul.u32 2, %s20
        $region24: #{tpu_custom_call.1} parent=19 // pred_fallthru
          _
        // Predicated region
        $region25: #{tpu_custom_call.1} parent=19 // pred_check
          %p183 = pneg %p83
        $region26: #{tpu_custom_call.1} parent=19 // pred_check_branch
          %185 = sbr.rel (%p183) target = $region28
        $region27: #{tpu_custom_call.1} parent=19 // pred_region
          %s186 = smul.u32 2, %s20
          %s187 = smul.u32 8, %s21
          %p188 = scmp.lt.s32.totalorder %s19, 1
          %s189 = scalar_select %p188, %s19, 1
          %p190 = scmp.lt.s32.totalorder %s186, 1
          %s191 = scalar_select %p190, %s186, 1
          %p192 = scmp.lt.s32.totalorder %s187, 7
          %s193 = scalar_select %p192, %s187, 7
          %s194 = smul.addr %s191, 8
          %s195 = sadd.s32 %s193, %s194
          %s196 = smul.addr %s189, 16
          %s197 = sadd.s32 %s195, %s196
          %s198 = smul.addr %s197, 4
          %s199 = scalar_lea.vmem %s1, %s198
          %s200 = smul.u32 2, %s20
          %s201 = smul.u32 8, %s21
        $region28: #{tpu_custom_call.1} parent=19 // pred_fallthru
          _
      $region20: #{tpu_custom_call.1} parent=5 // pred_fallthru
        _
      %p202 = scmp.le.s32.totalorder 1, %s12
      %p203 = scmp.lt.s32.totalorder %s12, 3
      %p204 = pnand %p202, %p203
      %p205 = pneg %p204
      // Predicated region
      $region29: #{tpu_custom_call.1} parent=5 // pred_check
        _
      $region30: #{tpu_custom_call.1} parent=5 // pred_check_branch
        %207 = sbr.rel (%p204) target = $region32
      $region31: #{tpu_custom_call.1} parent=5 // pred_region
        %s208 = ssub.s32 %s12, 1
        %s209 = smul.u32 2, %s23
        %p210 = scmp.lt.s32.totalorder %s22, 1
        %s211 = scalar_select %p210, %s22, 1
        %p212 = scmp.lt.s32.totalorder %s209, 1
        %s213 = scalar_select %p212, %s209, 1
        %s214 = smul.addr %s213, 8
        %s215 = smul.addr %s211, 16
        %s216 = sadd.s32 %s214, %s215
        %s217 = smul.addr %s216, 4
        %s218 = scalar_lea.vmem %s0, %s217
        %p219 = pneg %p59
        %p220 = pneg %p56
        %s221 = smul.u32 2, %s23
        %s222 = smul.u32 8, %s24
        %p223 = scmp.lt.s32.totalorder %s22, 1
        %s224 = scalar_select %p223, %s22, 1
        %p225 = scmp.lt.s32.totalorder %s221, 1
        %s226 = scalar_select %p225, %s221, 1
        %p227 = scmp.lt.s32.totalorder %s222, 7
        %s228 = scalar_select %p227, %s222, 7
        %s229 = smul.addr %s226, 8
        %s230 = sadd.s32 %s228, %s229
        %s231 = smul.addr %s224, 16
        %s232 = sadd.s32 %s230, %s231
        %s233 = smul.addr %s232, 4
        %s234 = scalar_lea.vmem %s1, %s233
        %p235 = pneg %p89
        %p236 = pneg %p86
        %p237 = scmp.lt.s32.totalorder %s24, 0
        %s238 = scalar_select %p237, %s24, 0
        %s239 = smul.addr %s238, 4
        %s240 = scalar_lea.vmem %s2, %s239
        %p241 = pneg %p115
        %p242 = pneg %p112
        %p243 = pneg %p143
        %p244 = pneg %p140
        %s245 = sand.u32 %s130, 1
        %s246 = scalar_lea.sflag [#allocation5], %s245
        %s247 = sand.u32 %s130, 1
        %s248 = smul.addr %s247, 2
        %s249 = scalar_lea.vmem [#allocation4], %s248
        %s250 = smul.u32 2, %s23
        %p251 = scmp.lt.s32.totalorder %s22, 1
        %s252 = scalar_select %p251, %s22, 1
        %p253 = scmp.lt.s32.totalorder %s250, 1
        %s254 = scalar_select %p253, %s250, 1
        %s255 = smul.addr %s254, 8
        %s256 = smul.addr %s252, 16
        %s257 = sadd.s32 %s255, %s256
        %s258 = smul.addr %s257, 4
        %s259 = scalar_lea.vmem %s0, %s258
        %s260 = smul.u32 2, %s23
        %s261 = smul.u32 2, %s23
        %s262 = smul.u32 8, %s24
        %p263 = scmp.lt.s32.totalorder %s22, 1
        %s264 = scalar_select %p263, %s22, 1
        %p265 = scmp.lt.s32.totalorder %s261, 1
        %s266 = scalar_select %p265, %s261, 1
        %p267 = scmp.lt.s32.totalorder %s262, 7
        %s268 = scalar_select %p267, %s262, 7
        %s269 = smul.addr %s266, 8
        %s270 = sadd.s32 %s268, %s269
        %s271 = smul.addr %s264, 16
        %s272 = sadd.s32 %s270, %s271
        %s273 = smul.addr %s272, 4
        %s274 = scalar_lea.vmem %s1, %s273
        %s275 = smul.u32 2, %s23
        %s276 = smul.u32 8, %s24
        %p277 = scmp.lt.s32.totalorder %s24, 0
        %s278 = scalar_select %p277, %s24, 0
        %s279 = smul.addr %s278, 4
        %s280 = scalar_lea.vmem %s2, %s279
        %p284 = scmp.eq.s32.totalorder %s24, 0
        // Predicated region
        $region33: #{tpu_custom_call.1} parent=31 // pred_check
          %p285 = pneg %p284
        $region34: #{tpu_custom_call.1} parent=31 // pred_check_branch
          %287 = sbr.rel (%p285) target = $region36
        $region35: #{tpu_custom_call.1} parent=31 // pred_region
          %vm288 = vcmask 517120
          %289 = vst.msk [vmem:[#allocation2] sm:$0x3] %vm288, -inf
          %vm290 = vcmask 261120
          %291 = vst.msk [vmem:[#allocation3] sm:$0xff] %vm290, 0.0
          %292 = vst.msk [vmem:[#allocation3 + $0x8] sm:$0xff] %vm290, 0.0
          %293 = vst.msk [vmem:[#allocation3 + $0x10] sm:$0xff] %vm290, 0.0
          %294 = vst.msk [vmem:[#allocation3 + $0x18] sm:$0xff] %vm290, 0.0
          %295 = vst.msk [vmem:[#allocation3 + $0x20] sm:$0xff] %vm290, 0.0
          %296 = vst.msk [vmem:[#allocation3 + $0x28] sm:$0xff] %vm290, 0.0
          %297 = vst.msk [vmem:[#allocation3 + $0x30] sm:$0xff] %vm290, 0.0
          %298 = vst.msk [vmem:[#allocation3 + $0x38] sm:$0xff] %vm290, 0.0
          %299 = vst.msk [vmem:[#allocation3 + $0x40] sm:$0xff] %vm290, 0.0
          %300 = vst.msk [vmem:[#allocation3 + $0x48] sm:$0xff] %vm290, 0.0
          %301 = vst.msk [vmem:[#allocation3 + $0x50] sm:$0xff] %vm290, 0.0
          %302 = vst.msk [vmem:[#allocation3 + $0x58] sm:$0xff] %vm290, 0.0
          %303 = vst.msk [vmem:[#allocation3 + $0x60] sm:$0xff] %vm290, 0.0
          %304 = vst.msk [vmem:[#allocation3 + $0x68] sm:$0xff] %vm290, 0.0
          %305 = vst.msk [vmem:[#allocation3 + $0x70] sm:$0xff] %vm290, 0.0
          %306 = vst.msk [vmem:[#allocation3 + $0x78] sm:$0xff] %vm290, 0.0
        $region36: #{tpu_custom_call.1} parent=31 // pred_fallthru
          _
        %v307 = vld [vmem:[%s259] sm:$0xf]
        %v308 = vld [vmem:[%s259 + $0x4] sm:$0xf]
        %v309 = vld [vmem:[%s259 + $0x8] sm:$0xf]
        %v310 = vld [vmem:[%s259 + $0xc] sm:$0xf]
        %v311 = vld [vmem:[%s259 + $0x10] sm:$0xf]
        %v312 = vld [vmem:[%s259 + $0x14] sm:$0xf]
        %v313 = vld [vmem:[%s259 + $0x18] sm:$0xf]
        %v314 = vld [vmem:[%s259 + $0x1c] sm:$0xf]
        %v315 = vld [vmem:[%s259 + $0x20] sm:$0xf]
        %v316 = vld [vmem:[%s259 + $0x24] sm:$0xf]
        %v317 = vld [vmem:[%s259 + $0x28] sm:$0xf]
        %v318 = vld [vmem:[%s259 + $0x2c] sm:$0xf]
        %v319 = vld [vmem:[%s259 + $0x30] sm:$0xf]
        %v320 = vld [vmem:[%s259 + $0x34] sm:$0xf]
        %v321 = vld [vmem:[%s259 + $0x38] sm:$0xf]
        %v322 = vld [vmem:[%s259 + $0x3c] sm:$0xf]
        %v323 = vld [vmem:[%s274] sm:$0xf]
        %v324 = vld [vmem:[%s274 + $0x4] sm:$0xf]
        %v325 = vld [vmem:[%s274 + $0x8] sm:$0xf]
        %v326 = vld [vmem:[%s274 + $0xc] sm:$0xf]
        %v327 = vld [vmem:[%s274 + $0x10] sm:$0xf]
        %v328 = vld [vmem:[%s274 + $0x14] sm:$0xf]
        %v329 = vld [vmem:[%s274 + $0x18] sm:$0xf]
        %v330 = vld [vmem:[%s274 + $0x1c] sm:$0xf]
        %v331 = vld [vmem:[%s274 + $0x20] sm:$0xf]
        %v332 = vld [vmem:[%s274 + $0x24] sm:$0xf]
        %v333 = vld [vmem:[%s274 + $0x28] sm:$0xf]
        %v334 = vld [vmem:[%s274 + $0x2c] sm:$0xf]
        %v335 = vld [vmem:[%s274 + $0x30] sm:$0xf]
        %v336 = vld [vmem:[%s274 + $0x34] sm:$0xf]
        %v337 = vld [vmem:[%s274 + $0x38] sm:$0xf]
        %v338 = vld [vmem:[%s274 + $0x3c] sm:$0xf]
        %v339 = vld [vmem:[%s280] sm:$0xf]
        %v340 = vld [vmem:[%s280 + $0x4] sm:$0xf]
        %v341 = vld [vmem:[%s280 + $0x8] sm:$0xf]
        %v342 = vld [vmem:[%s280 + $0xc] sm:$0xf]
        %v343 = vld [vmem:[%s280 + $0x10] sm:$0xf]
        %v344 = vld [vmem:[%s280 + $0x14] sm:$0xf]
        %v345 = vld [vmem:[%s280 + $0x18] sm:$0xf]
        %v346 = vld [vmem:[%s280 + $0x1c] sm:$0xf]
        %v355 = vunpack.c.l.b16 %v307
        %v356 = vunpack.c.l.b16 %v308
        %v357 = vunpack.c.l.b16 %v309
        %v358 = vunpack.c.l.b16 %v310
        %v359 = vunpack.c.l.b16 %v311
        %v360 = vunpack.c.l.b16 %v312
        %v361 = vunpack.c.l.b16 %v313
        %v362 = vunpack.c.l.b16 %v314
        %v363 = vpack.c.b16 %v356, %v355
        %v364 = vpack.c.b16 %v358, %v357
        %v365 = vpack.c.b16 %v360, %v359
        %v366 = vpack.c.b16 %v362, %v361
        %v375 = vunpack.c.l.b16 %v323
        %v376 = vunpack.c.l.b16 %v324
        %v377 = vunpack.c.l.b16 %v325
        %v378 = vunpack.c.l.b16 %v326
        %v379 = vunpack.c.l.b16 %v327
        %v380 = vunpack.c.l.b16 %v328
        %v381 = vunpack.c.l.b16 %v329
        %v382 = vunpack.c.l.b16 %v330
        %v383 = vpack.c.b16 %v376, %v375
        %v384 = vpack.c.b16 %v378, %v377
        %v385 = vpack.c.b16 %v380, %v379
        %v386 = vpack.c.b16 %v382, %v381
        %vm387 = vcmask 261120
        %v389 = vsel %vm387, %v363, 0
        %v392 = vsel %vm387, %v364, 0
        %v395 = vsel %vm387, %v365, 0
        %v398 = vsel %vm387, %v366, 0
        %v401 = vsel %vm387, %v383, 0
        %v404 = vsel %vm387, %v384, 0
        %v407 = vsel %vm387, %v385, 0
        %v410 = vsel %vm387, %v386, 0
        %412 = vmatprep.subr.bf16.mxu0 0
        %413 = vmatpush1.bf16.xpose.msra.mxu0 0
        %414 = vmatprep.subr.bf16.mxu0 0
        %415 = vmatpush1.bf16.xpose.msra.mxu0 0
        %416 = vmatprep.subr.bf16.mxu0 0
        %417 = vmatpush1.bf16.xpose.msra.mxu0 0
        %418 = vmatprep.subr.bf16.mxu0 0
        %419 = vmatpush1.bf16.xpose.msra.mxu0 0
        %420 = vmatprep.subr.bf16.mxu0 0
        %421 = vmatpush1.bf16.xpose.msra.mxu0 %v410
        %422 = vmatprep.subr.bf16.mxu0 0
        %423 = vmatpush1.bf16.xpose.msra.mxu0 %v407
        %424 = vmatprep.subr.bf16.mxu0 0
        %425 = vmatpush1.bf16.xpose.msra.mxu0 %v404
        %426 = vmatprep.subr.bf16.mxu0 0
        %427 = vmatpush1.bf16.xpose.msra.mxu0 %v401
        %428 = vmatprep.subr.bf16.mxu0 0
        %429 = vmatpush2.bf16.xpose.msra.mxu0 0
        %430 = vmatprep.subr.bf16.mxu0 0
        %431 = vmatpush2.bf16.xpose.msra.mxu0 0
        %432 = vmatprep.subr.bf16.mxu0 0
        %433 = vmatpush2.bf16.xpose.msra.mxu0 0
        %434 = vmatprep.subr.bf16.mxu0 0
        %435 = vmatpush2.bf16.xpose.msra.mxu0 0
        %436 = vmatprep.subr.bf16.mxu0 0
        %437 = vmatpush2.bf16.xpose.msra.mxu0 0
        %438 = vmatprep.subr.bf16.mxu0 0
        %439 = vmatpush2.bf16.xpose.msra.mxu0 0
        %440 = vmatprep.subr.bf16.mxu0 0
        %441 = vmatpush2.bf16.xpose.msra.mxu0 0
        %442 = vmatprep.subr.bf16.mxu0 0
        %443 = vmatpush2.bf16.xpose.msra.mxu0 0
        %444 = vmatprep.mubr.bf16.mxu0 0
        %445 = vmatmul.mubr.bf16.gmra.mxu0 %v389
        %v446 = vpop.f32.mrf.mxu0
        %v447 = vadd.f32 0.0, %v446
        %v448 = vpop.f32.mrf.mxu0
        %v449 = vpop.f32.mrf.mxu0
        %v450 = vadd.f32 0.0, %v449
        %v451 = vpop.f32.mrf.mxu0
        %452 = vmatprep.mubr.bf16.mxu0 0
        %453 = vmatmul.mubr.bf16.gmra.mxu0 %v392
        %v454 = vpop.f32.mrf.mxu0
        %v455 = vadd.f32 0.0, %v454
        %v456 = vpop.f32.mrf.mxu0
        %v457 = vpop.f32.mrf.mxu0
        %v458 = vadd.f32 0.0, %v457
        %v459 = vpop.f32.mrf.mxu0
        %460 = vmatprep.mubr.bf16.mxu0 0
        %461 = vmatmul.mubr.bf16.gmra.mxu0 %v395
        %v462 = vpop.f32.mrf.mxu0
        %v463 = vadd.f32 0.0, %v462
        %v464 = vpop.f32.mrf.mxu0
        %v465 = vpop.f32.mrf.mxu0
        %v466 = vadd.f32 0.0, %v465
        %v467 = vpop.f32.mrf.mxu0
        %468 = vmatprep.mubr.bf16.mxu0 0
        %469 = vmatmul.mubr.bf16.gmra.mxu0 %v398
        %v470 = vpop.f32.mrf.mxu0
        %v471 = vadd.f32 0.0, %v470
        %v472 = vpop.f32.mrf.mxu0
        %v473 = vpop.f32.mrf.mxu0
        %v474 = vadd.f32 0.0, %v473
        %v475 = vpop.f32.mrf.mxu0
        %476 = vdwg.mxu0
        %v485 = vunpack.c.l.b16 %v315
        %v486 = vunpack.c.l.b16 %v316
        %v487 = vunpack.c.l.b16 %v317
        %v488 = vunpack.c.l.b16 %v318
        %v489 = vunpack.c.l.b16 %v319
        %v490 = vunpack.c.l.b16 %v320
        %v491 = vunpack.c.l.b16 %v321
        %v492 = vunpack.c.l.b16 %v322
        %v493 = vpack.c.b16 %v486, %v485
        %v494 = vpack.c.b16 %v488, %v487
        %v495 = vpack.c.b16 %v490, %v489
        %v496 = vpack.c.b16 %v492, %v491
        %v505 = vunpack.c.l.b16 %v331
        %v506 = vunpack.c.l.b16 %v332
        %v507 = vunpack.c.l.b16 %v333
        %v508 = vunpack.c.l.b16 %v334
        %v509 = vunpack.c.l.b16 %v335
        %v510 = vunpack.c.l.b16 %v336
        %v511 = vunpack.c.l.b16 %v337
        %v512 = vunpack.c.l.b16 %v338
        %v513 = vpack.c.b16 %v506, %v505
        %v514 = vpack.c.b16 %v508, %v507
        %v515 = vpack.c.b16 %v510, %v509
        %v516 = vpack.c.b16 %v512, %v511
        %v518 = vsel %vm387, %v493, 0
        %v521 = vsel %vm387, %v494, 0
        %v524 = vsel %vm387, %v495, 0
        %v527 = vsel %vm387, %v496, 0
        %v530 = vsel %vm387, %v513, 0
        %v533 = vsel %vm387, %v514, 0
        %v536 = vsel %vm387, %v515, 0
        %v539 = vsel %vm387, %v516, 0
        %541 = vmatprep.subr.bf16.mxu0 0
        %542 = vmatpush1.bf16.xpose.msra.mxu0 0
        %543 = vmatprep.subr.bf16.mxu0 0
        %544 = vmatpush1.bf16.xpose.msra.mxu0 0
        %545 = vmatprep.subr.bf16.mxu0 0
        %546 = vmatpush1.bf16.xpose.msra.mxu0 0
        %547 = vmatprep.subr.bf16.mxu0 0
        %548 = vmatpush1.bf16.xpose.msra.mxu0 0
        %549 = vmatprep.subr.bf16.mxu0 0
        %550 = vmatpush1.bf16.xpose.msra.mxu0 %v539
        %551 = vmatprep.subr.bf16.mxu0 0
        %552 = vmatpush1.bf16.xpose.msra.mxu0 %v536
        %553 = vmatprep.subr.bf16.mxu0 0
        %554 = vmatpush1.bf16.xpose.msra.mxu0 %v533
        %555 = vmatprep.subr.bf16.mxu0 0
        %556 = vmatpush1.bf16.xpose.msra.mxu0 %v530
        %557 = vmatprep.subr.bf16.mxu0 0
        %558 = vmatpush2.bf16.xpose.msra.mxu0 0
        %559 = vmatprep.subr.bf16.mxu0 0
        %560 = vmatpush2.bf16.xpose.msra.mxu0 0
        %561 = vmatprep.subr.bf16.mxu0 0
        %562 = vmatpush2.bf16.xpose.msra.mxu0 0
        %563 = vmatprep.subr.bf16.mxu0 0
        %564 = vmatpush2.bf16.xpose.msra.mxu0 0
        %565 = vmatprep.subr.bf16.mxu0 0
        %566 = vmatpush2.bf16.xpose.msra.mxu0 0
        %567 = vmatprep.subr.bf16.mxu0 0
        %568 = vmatpush2.bf16.xpose.msra.mxu0 0
        %569 = vmatprep.subr.bf16.mxu0 0
        %570 = vmatpush2.bf16.xpose.msra.mxu0 0
        %571 = vmatprep.subr.bf16.mxu0 0
        %572 = vmatpush2.bf16.xpose.msra.mxu0 0
        %573 = vmatprep.mubr.bf16.mxu0 0
        %574 = vmatmul.mubr.bf16.gmra.mxu0 %v518
        %v575 = vpop.f32.mrf.mxu0
        %v576 = vadd.f32 0.0, %v575
        %v577 = vpop.f32.mrf.mxu0
        %v578 = vpop.f32.mrf.mxu0
        %v579 = vadd.f32 0.0, %v578
        %v580 = vpop.f32.mrf.mxu0
        %581 = vmatprep.mubr.bf16.mxu0 0
        %582 = vmatmul.mubr.bf16.gmra.mxu0 %v521
        %v583 = vpop.f32.mrf.mxu0
        %v584 = vadd.f32 0.0, %v583
        %v585 = vpop.f32.mrf.mxu0
        %v586 = vpop.f32.mrf.mxu0
        %v587 = vadd.f32 0.0, %v586
        %v588 = vpop.f32.mrf.mxu0
        %589 = vmatprep.mubr.bf16.mxu0 0
        %590 = vmatmul.mubr.bf16.gmra.mxu0 %v524
        %v591 = vpop.f32.mrf.mxu0
        %v592 = vadd.f32 0.0, %v591
        %v593 = vpop.f32.mrf.mxu0
        %v594 = vpop.f32.mrf.mxu0
        %v595 = vadd.f32 0.0, %v594
        %v596 = vpop.f32.mrf.mxu0
        %597 = vmatprep.mubr.bf16.mxu0 0
        %598 = vmatmul.mubr.bf16.gmra.mxu0 %v527
        %v599 = vpop.f32.mrf.mxu0
        %v600 = vadd.f32 0.0, %v599
        %v601 = vpop.f32.mrf.mxu0
        %v602 = vpop.f32.mrf.mxu0
        %v603 = vadd.f32 0.0, %v602
        %v604 = vpop.f32.mrf.mxu0
        %605 = vdwg.mxu0
        %vm606 = vcmp.gt.bf16.partialorder %v339, 0
        %vm607 = vcmp.gt.bf16.partialorder %v340, 0
        %vm608 = vcmp.gt.bf16.partialorder %v341, 0
        %vm609 = vcmp.gt.bf16.partialorder %v342, 0
        %vm610 = vcmp.gt.bf16.partialorder %v343, 0
        %vm611 = vcmp.gt.bf16.partialorder %v344, 0
        %vm612 = vcmp.gt.bf16.partialorder %v345, 0
        %vm613 = vcmp.gt.bf16.partialorder %v346, 0
        %v614 = vsel %vm606, 65537, 0
        %v615 = vsel %vm607, 65537, 0
        %v616 = vsel %vm608, 65537, 0
        %v617 = vsel %vm609, 65537, 0
        %v618 = vsel %vm610, 65537, 0
        %v619 = vsel %vm611, 65537, 0
        %v620 = vsel %vm612, 65537, 0
        %v621 = vsel %vm613, 65537, 0
        %v622 = vunpack.c.l.b16 %v614
        %v623 = vunpack.c.l.b16 %v615
        %v624 = vunpack.c.l.b16 %v616
        %v625 = vunpack.c.l.b16 %v617
        %v626 = vunpack.c.l.b16 %v618
        %v627 = vunpack.c.l.b16 %v619
        %v628 = vunpack.c.l.b16 %v620
        %v629 = vunpack.c.l.b16 %v621
        %vm630 = vcmp.ne.s32.totalorder %v622, 0
        %vm631 = vcmp.ne.s32.totalorder %v623, 0
        %vm632 = vcmp.ne.s32.totalorder %v624, 0
        %vm633 = vcmp.ne.s32.totalorder %v625, 0
        %vm634 = vcmp.ne.s32.totalorder %v626, 0
        %vm635 = vcmp.ne.s32.totalorder %v627, 0
        %vm636 = vcmp.ne.s32.totalorder %v628, 0
        %vm637 = vcmp.ne.s32.totalorder %v629, 0
        %v638 = vsel %vm630, 1, 0
        %v639 = vsel %vm631, 1, 0
        %v640 = vsel %vm632, 1, 0
        %v641 = vsel %vm633, 1, 0
        %v642 = vsel %vm634, 1, 0
        %v643 = vsel %vm635, 1, 0
        %v644 = vsel %vm636, 1, 0
        %v645 = vsel %vm637, 1, 0
        %vm646 = vcmp.eq.s32.totalorder %v638, 1
        %vm647 = vcmp.eq.s32.totalorder %v639, 1
        %vm648 = vcmp.eq.s32.totalorder %v640, 1
        %vm649 = vcmp.eq.s32.totalorder %v641, 1
        %vm650 = vcmp.eq.s32.totalorder %v642, 1
        %vm651 = vcmp.eq.s32.totalorder %v643, 1
        %vm652 = vcmp.eq.s32.totalorder %v644, 1
        %vm653 = vcmp.eq.s32.totalorder %v645, 1
        %v654 = vsel %vm646, %v447, -inf
        %v655 = vsel %vm647, %v450, -inf
        %v656 = vsel %vm648, %v455, -inf
        %v657 = vsel %vm649, %v458, -inf
        %v658 = vsel %vm650, %v463, -inf
        %v659 = vsel %vm651, %v466, -inf
        %v660 = vsel %vm652, %v471, -inf
        %v661 = vsel %vm653, %v474, -inf
        %v662 = vsel %vm646, %v576, -inf
        %v663 = vsel %vm647, %v579, -inf
        %v664 = vsel %vm648, %v584, -inf
        %v665 = vsel %vm649, %v587, -inf
        %v666 = vsel %vm650, %v592, -inf
        %v667 = vsel %vm651, %v595, -inf
        %v668 = vsel %vm652, %v600, -inf
        %v669 = vsel %vm653, %v603, -inf
        %v670 = vld [vmem:[#allocation2] sm:$0x3]
        %vm671 = vcmask 523264
        %v672 = vsel %vm671, %v654, -inf
        %673 = vmax.xlane.f32.xlu0 %v672
        %v674 = vpop.xlane.xlu0 %673
        %v675 = vsel %vm671, %v655, -inf
        %676 = vmax.xlane.f32.xlu0 %v675
        %v677 = vpop.xlane.xlu0 %676
        %v678 = vsel %vm671, %v656, -inf
        %679 = vmax.xlane.f32.xlu0 %v678
        %v680 = vpop.xlane.xlu0 %679
        %v681 = vsel %vm671, %v657, -inf
        %682 = vmax.xlane.f32.xlu0 %v681
        %v683 = vpop.xlane.xlu0 %682
        %v684 = vsel %vm671, %v658, -inf
        %685 = vmax.xlane.f32.xlu0 %v684
        %v686 = vpop.xlane.xlu0 %685
        %v687 = vsel %vm671, %v659, -inf
        %688 = vmax.xlane.f32.xlu0 %v687
        %v689 = vpop.xlane.xlu0 %688
        %v690 = vsel %vm671, %v660, -inf
        %691 = vmax.xlane.f32.xlu0 %v690
        %v692 = vpop.xlane.xlu0 %691
        %v693 = vsel %vm671, %v661, -inf
        %694 = vmax.xlane.f32.xlu0 %v693
        %v695 = vpop.xlane.xlu0 %694
        %v696 = vsel %vm671, %v662, -inf
        %697 = vmax.xlane.f32.xlu0 %v696
        %v698 = vpop.xlane.xlu0 %697
        %v699 = vsel %vm671, %v663, -inf
        %700 = vmax.xlane.f32.xlu0 %v699
        %v701 = vpop.xlane.xlu0 %700
        %v702 = vsel %vm671, %v664, -inf
        %703 = vmax.xlane.f32.xlu0 %v702
        %v704 = vpop.xlane.xlu0 %703
        %v705 = vsel %vm671, %v665, -inf
        %706 = vmax.xlane.f32.xlu0 %v705
        %v707 = vpop.xlane.xlu0 %706
        %v708 = vsel %vm671, %v666, -inf
        %709 = vmax.xlane.f32.xlu0 %v708
        %v710 = vpop.xlane.xlu0 %709
        %v711 = vsel %vm671, %v667, -inf
        %712 = vmax.xlane.f32.xlu0 %v711
        %v713 = vpop.xlane.xlu0 %712
        %v714 = vsel %vm671, %v668, -inf
        %715 = vmax.xlane.f32.xlu0 %v714
        %v716 = vpop.xlane.xlu0 %715
        %v717 = vsel %vm671, %v669, -inf
        %718 = vmax.xlane.f32.xlu0 %v717
        %v719 = vpop.xlane.xlu0 %718
        %v736 = vlaneseq
        %v737 = vand.u32 %v736, 127
        %v738 = vlaneseq
        %v739 = vshrl.u32 %v738, 7
        %v740 = vsub.s32 %v737, %v739
        %v741 = vrot.slane %v674, %v740
        %v742 = vadd.s32 %v737, 4294967288
        %v743 = vlaneseq
        %v744 = vshrl.u32 %v743, 7
        %v745 = vsub.s32 %v742, %v744
        %v746 = vrot.slane %v677, %v745
        %vm747 = vcmask 130112
        %v748 = vsel %vm747, %v746, %v741
        %v749 = vadd.s32 %v737, 4294967280
        %v750 = vlaneseq
        %v751 = vshrl.u32 %v750, 7
        %v752 = vsub.s32 %v749, %v751
        %v753 = vrot.slane %v680, %v752
        %vm754 = vcmask 195712
        %v755 = vsel %vm754, %v753, %v748
        %v756 = vadd.s32 %v737, 4294967272
        %v757 = vlaneseq
        %v758 = vshrl.u32 %v757, 7
        %v759 = vsub.s32 %v756, %v758
        %v760 = vrot.slane %v683, %v759
        %vm761 = vcmask 261312
        %v762 = vsel %vm761, %v760, %v755
        %v763 = vadd.s32 %v737, 4294967264
        %v764 = vlaneseq
        %v765 = vshrl.u32 %v764, 7
        %v766 = vsub.s32 %v763, %v765
        %v767 = vrot.slane %v686, %v766
        %vm768 = vcmask 326912
        %v769 = vsel %vm768, %v767, %v762
        %v770 = vadd.s32 %v737, 4294967256
        %v771 = vlaneseq
        %v772 = vshrl.u32 %v771, 7
        %v773 = vsub.s32 %v770, %v772
        %v774 = vrot.slane %v689, %v773
        %vm775 = vcmask 392512
        %v776 = vsel %vm775, %v774, %v769
        %v777 = vadd.s32 %v737, 4294967248
        %v778 = vlaneseq
        %v779 = vshrl.u32 %v778, 7
        %v780 = vsub.s32 %v777, %v779
        %v781 = vrot.slane %v692, %v780
        %vm782 = vcmask 458112
        %v783 = vsel %vm782, %v781, %v776
        %v784 = vadd.s32 %v737, 4294967240
        %v785 = vlaneseq
        %v786 = vshrl.u32 %v785, 7
        %v787 = vsub.s32 %v784, %v786
        %v788 = vrot.slane %v695, %v787
        %vm789 = vcmask 523712
        %v790 = vsel %vm789, %v788, %v783
        %v791 = vlaneseq
        %v792 = vshrl.u32 %v791, 7
        %v793 = vsub.s32 %v737, %v792
        %v794 = vrot.slane %v698, %v793
        %v795 = vlaneseq
        %v796 = vshrl.u32 %v795, 7
        %v797 = vsub.s32 %v742, %v796
        %v798 = vrot.slane %v701, %v797
        %v799 = vsel %vm747, %v798, %v794
        %v800 = vlaneseq
        %v801 = vshrl.u32 %v800, 7
        %v802 = vsub.s32 %v749, %v801
        %v803 = vrot.slane %v704, %v802
        %v804 = vsel %vm754, %v803, %v799
        %v805 = vlaneseq
        %v806 = vshrl.u32 %v805, 7
        %v807 = vsub.s32 %v756, %v806
        %v808 = vrot.slane %v707, %v807
        %v809 = vsel %vm761, %v808, %v804
        %v810 = vlaneseq
        %v811 = vshrl.u32 %v810, 7
        %v812 = vsub.s32 %v763, %v811
        %v813 = vrot.slane %v710, %v812
        %v814 = vsel %vm768, %v813, %v809
        %v815 = vlaneseq
        %v816 = vshrl.u32 %v815, 7
        %v817 = vsub.s32 %v770, %v816
        %v818 = vrot.slane %v713, %v817
        %v819 = vsel %vm775, %v818, %v814
        %v820 = vlaneseq
        %v821 = vshrl.u32 %v820, 7
        %v822 = vsub.s32 %v777, %v821
        %v823 = vrot.slane %v716, %v822
        %v824 = vsel %vm782, %v823, %v819
        %v825 = vlaneseq
        %v826 = vshrl.u32 %v825, 7
        %v827 = vsub.s32 %v784, %v826
        %v828 = vrot.slane %v719, %v827
        %v829 = vsel %vm789, %v828, %v824
        %vm830 = vcmask 1041409
        %v831 = vsel %vm830, %v829, %v790
        %v833 = vmax.f32 %v670, %v831
        %vm834 = vcmask 517120
        %835 = vst.msk [vmem:[#allocation2] sm:$0x3] %vm834, %v833
        %v836 = vld [vmem:[#allocation3] sm:$0xff]
        %v837 = vld [vmem:[#allocation3 + $0x8] sm:$0xff]
        %v838 = vld [vmem:[#allocation3 + $0x10] sm:$0xff]
        %v839 = vld [vmem:[#allocation3 + $0x18] sm:$0xff]
        %v840 = vld [vmem:[#allocation3 + $0x20] sm:$0xff]
        %v841 = vld [vmem:[#allocation3 + $0x28] sm:$0xff]
        %v842 = vld [vmem:[#allocation3 + $0x30] sm:$0xff]
        %v843 = vld [vmem:[#allocation3 + $0x38] sm:$0xff]
        %v852 = vunpack.c.l.b16 %v339
        %v853 = vunpack.c.l.b16 %v340
        %v854 = vunpack.c.l.b16 %v341
        %v855 = vunpack.c.l.b16 %v342
        %v856 = vunpack.c.l.b16 %v343
        %v857 = vunpack.c.l.b16 %v344
        %v858 = vunpack.c.l.b16 %v345
        %v859 = vunpack.c.l.b16 %v346
        %v860 = vpack.c.b16 %v853, %v852
        %v861 = vpack.c.b16 %v855, %v854
        %v862 = vpack.c.b16 %v857, %v856
        %v863 = vpack.c.b16 %v859, %v858
        %v869 = vsel %vm671, %v860, 0
        %v872 = vsel %vm671, %v861, 0
        %v875 = vsel %vm671, %v862, 0
        %v878 = vsel %vm671, %v863, 0
        %880 = vmatprep.subr.bf16.mxu0 0
        %881 = vmatpush1.bf16.msra.mxu0 0
        %882 = vmatprep.subr.bf16.mxu0 0
        %883 = vmatpush1.bf16.msra.mxu0 0
        %884 = vmatprep.subr.bf16.mxu0 0
        %885 = vmatpush1.bf16.msra.mxu0 0
        %886 = vmatprep.subr.bf16.mxu0 0
        %887 = vmatpush1.bf16.msra.mxu0 0
        %888 = vmatprep.subr.bf16.mxu0 0
        %889 = vmatpush1.bf16.msra.mxu0 %v386
        %890 = vmatprep.subr.bf16.mxu0 0
        %891 = vmatpush1.bf16.msra.mxu0 %v385
        %892 = vmatprep.subr.bf16.mxu0 0
        %893 = vmatpush1.bf16.msra.mxu0 %v384
        %894 = vmatprep.subr.bf16.mxu0 0
        %895 = vmatpush1.bf16.msra.mxu0 %v383
        %896 = vmatprep.subr.bf16.mxu0 0
        %897 = vmatpush2.bf16.msra.mxu0 0
        %898 = vmatprep.subr.bf16.mxu0 0
        %899 = vmatpush2.bf16.msra.mxu0 0
        %900 = vmatprep.subr.bf16.mxu0 0
        %901 = vmatpush2.bf16.msra.mxu0 0
        %902 = vmatprep.subr.bf16.mxu0 0
        %903 = vmatpush2.bf16.msra.mxu0 0
        %904 = vmatprep.subr.bf16.mxu0 0
        %905 = vmatpush2.bf16.msra.mxu0 0
        %906 = vmatprep.subr.bf16.mxu0 0
        %907 = vmatpush2.bf16.msra.mxu0 0
        %908 = vmatprep.subr.bf16.mxu0 0
        %909 = vmatpush2.bf16.msra.mxu0 0
        %910 = vmatprep.subr.bf16.mxu0 0
        %911 = vmatpush2.bf16.msra.mxu0 0
        %912 = vmatprep.mubr.bf16.mxu0 0
        %913 = vmatmul.mubr.bf16.gmra.mxu0 %v869
        %v914 = vpop.f32.mrf.mxu0
        %v915 = vadd.f32 0.0, %v914
        %v916 = vpop.f32.mrf.mxu0
        %v917 = vpop.f32.mrf.mxu0
        %v918 = vadd.f32 0.0, %v917
        %v919 = vpop.f32.mrf.mxu0
        %920 = vmatprep.mubr.bf16.mxu0 0
        %921 = vmatmul.mubr.bf16.gmra.mxu0 %v872
        %v922 = vpop.f32.mrf.mxu0
        %v923 = vadd.f32 0.0, %v922
        %v924 = vpop.f32.mrf.mxu0
        %v925 = vpop.f32.mrf.mxu0
        %v926 = vadd.f32 0.0, %v925
        %v927 = vpop.f32.mrf.mxu0
        %928 = vmatprep.mubr.bf16.mxu0 0
        %929 = vmatmul.mubr.bf16.gmra.mxu0 %v875
        %v930 = vpop.f32.mrf.mxu0
        %v931 = vadd.f32 0.0, %v930
        %v932 = vpop.f32.mrf.mxu0
        %v933 = vpop.f32.mrf.mxu0
        %v934 = vadd.f32 0.0, %v933
        %v935 = vpop.f32.mrf.mxu0
        %936 = vmatprep.mubr.bf16.mxu0 0
        %937 = vmatmul.mubr.bf16.gmra.mxu0 %v878
        %v938 = vpop.f32.mrf.mxu0
        %v939 = vadd.f32 0.0, %v938
        %v940 = vpop.f32.mrf.mxu0
        %v941 = vpop.f32.mrf.mxu0
        %v942 = vadd.f32 0.0, %v941
        %v943 = vpop.f32.mrf.mxu0
        %944 = vdwg.mxu0
        %v945 = vadd.f32 %v836, %v915
        %v946 = vadd.f32 %v837, %v918
        %v947 = vadd.f32 %v838, %v923
        %v948 = vadd.f32 %v839, %v926
        %v949 = vadd.f32 %v840, %v931
        %v950 = vadd.f32 %v841, %v934
        %v951 = vadd.f32 %v842, %v939
        %v952 = vadd.f32 %v843, %v942
        %953 = vst.msk [vmem:[#allocation3] sm:$0xff] %vm387, %v945
        %954 = vst.msk [vmem:[#allocation3 + $0x8] sm:$0xff] %vm387, %v946
        %955 = vst.msk [vmem:[#allocation3 + $0x10] sm:$0xff] %vm387, %v947
        %956 = vst.msk [vmem:[#allocation3 + $0x18] sm:$0xff] %vm387, %v948
        %957 = vst.msk [vmem:[#allocation3 + $0x20] sm:$0xff] %vm387, %v949
        %958 = vst.msk [vmem:[#allocation3 + $0x28] sm:$0xff] %vm387, %v950
        %959 = vst.msk [vmem:[#allocation3 + $0x30] sm:$0xff] %vm387, %v951
        %960 = vst.msk [vmem:[#allocation3 + $0x38] sm:$0xff] %vm387, %v952
        %s961 = scalar_lea.vmem [#allocation3], 64
        %v962 = vld [vmem:[%s961] sm:$0xff]
        %v963 = vld [vmem:[%s961 + $0x8] sm:$0xff]
        %v964 = vld [vmem:[%s961 + $0x10] sm:$0xff]
        %v965 = vld [vmem:[%s961 + $0x18] sm:$0xff]
        %v966 = vld [vmem:[%s961 + $0x20] sm:$0xff]
        %v967 = vld [vmem:[%s961 + $0x28] sm:$0xff]
        %v968 = vld [vmem:[%s961 + $0x30] sm:$0xff]
        %v969 = vld [vmem:[%s961 + $0x38] sm:$0xff]
        %974 = vmatprep.subr.bf16.mxu0 0
        %975 = vmatpush1.bf16.msra.mxu0 0
        %976 = vmatprep.subr.bf16.mxu0 0
        %977 = vmatpush1.bf16.msra.mxu0 0
        %978 = vmatprep.subr.bf16.mxu0 0
        %979 = vmatpush1.bf16.msra.mxu0 0
        %980 = vmatprep.subr.bf16.mxu0 0
        %981 = vmatpush1.bf16.msra.mxu0 0
        %982 = vmatprep.subr.bf16.mxu0 0
        %983 = vmatpush1.bf16.msra.mxu0 %v516
        %984 = vmatprep.subr.bf16.mxu0 0
        %985 = vmatpush1.bf16.msra.mxu0 %v515
        %986 = vmatprep.subr.bf16.mxu0 0
        %987 = vmatpush1.bf16.msra.mxu0 %v514
        %988 = vmatprep.subr.bf16.mxu0 0
        %989 = vmatpush1.bf16.msra.mxu0 %v513
        %990 = vmatprep.subr.bf16.mxu0 0
        %991 = vmatpush2.bf16.msra.mxu0 0
        %992 = vmatprep.subr.bf16.mxu0 0
        %993 = vmatpush2.bf16.msra.mxu0 0
        %994 = vmatprep.subr.bf16.mxu0 0
        %995 = vmatpush2.bf16.msra.mxu0 0
        %996 = vmatprep.subr.bf16.mxu0 0
        %997 = vmatpush2.bf16.msra.mxu0 0
        %998 = vmatprep.subr.bf16.mxu0 0
        %999 = vmatpush2.bf16.msra.mxu0 0
        %1000 = vmatprep.subr.bf16.mxu0 0
        %1001 = vmatpush2.bf16.msra.mxu0 0
        %1002 = vmatprep.subr.bf16.mxu0 0
        %1003 = vmatpush2.bf16.msra.mxu0 0
        %1004 = vmatprep.subr.bf16.mxu0 0
        %1005 = vmatpush2.bf16.msra.mxu0 0
        %1006 = vmatprep.mubr.bf16.mxu0 0
        %1007 = vmatmul.mubr.bf16.gmra.mxu0 %v869
        %v1008 = vpop.f32.mrf.mxu0
        %v1009 = vadd.f32 0.0, %v1008
        %v1010 = vpop.f32.mrf.mxu0
        %v1011 = vpop.f32.mrf.mxu0
        %v1012 = vadd.f32 0.0, %v1011
        %v1013 = vpop.f32.mrf.mxu0
        %1014 = vmatprep.mubr.bf16.mxu0 0
        %1015 = vmatmul.mubr.bf16.gmra.mxu0 %v872
        %v1016 = vpop.f32.mrf.mxu0
        %v1017 = vadd.f32 0.0, %v1016
        %v1018 = vpop.f32.mrf.mxu0
        %v1019 = vpop.f32.mrf.mxu0
        %v1020 = vadd.f32 0.0, %v1019
        %v1021 = vpop.f32.mrf.mxu0
        %1022 = vmatprep.mubr.bf16.mxu0 0
        %1023 = vmatmul.mubr.bf16.gmra.mxu0 %v875
        %v1024 = vpop.f32.mrf.mxu0
        %v1025 = vadd.f32 0.0, %v1024
        %v1026 = vpop.f32.mrf.mxu0
        %v1027 = vpop.f32.mrf.mxu0
        %v1028 = vadd.f32 0.0, %v1027
        %v1029 = vpop.f32.mrf.mxu0
        %1030 = vmatprep.mubr.bf16.mxu0 0
        %1031 = vmatmul.mubr.bf16.gmra.mxu0 %v878
        %v1032 = vpop.f32.mrf.mxu0
        %v1033 = vadd.f32 0.0, %v1032
        %v1034 = vpop.f32.mrf.mxu0
        %v1035 = vpop.f32.mrf.mxu0
        %v1036 = vadd.f32 0.0, %v1035
        %v1037 = vpop.f32.mrf.mxu0
        %1038 = vdwg.mxu0
        %v1039 = vadd.f32 %v962, %v1009
        %v1040 = vadd.f32 %v963, %v1012
        %v1041 = vadd.f32 %v964, %v1017
        %v1042 = vadd.f32 %v965, %v1020
        %v1043 = vadd.f32 %v966, %v1025
        %v1044 = vadd.f32 %v967, %v1028
        %v1045 = vadd.f32 %v968, %v1033
        %v1046 = vadd.f32 %v969, %v1036
        %1047 = vst.msk [vmem:[%s961] sm:$0xff] %vm387, %v1039
        %1048 = vst.msk [vmem:[%s961 + $0x8] sm:$0xff] %vm387, %v1040
        %1049 = vst.msk [vmem:[%s961 + $0x10] sm:$0xff] %vm387, %v1041
        %1050 = vst.msk [vmem:[%s961 + $0x18] sm:$0xff] %vm387, %v1042
        %1051 = vst.msk [vmem:[%s961 + $0x20] sm:$0xff] %vm387, %v1043
        %1052 = vst.msk [vmem:[%s961 + $0x28] sm:$0xff] %vm387, %v1044
        %1053 = vst.msk [vmem:[%s961 + $0x30] sm:$0xff] %vm387, %v1045
        %1054 = vst.msk [vmem:[%s961 + $0x38] sm:$0xff] %vm387, %v1046
        // Predicated region
        $region37: #{tpu_custom_call.1} parent=31 // pred_check
          %p1055 = pneg %p284
        $region38: #{tpu_custom_call.1} parent=31 // pred_check_branch
          %1057 = sbr.rel (%p1055) target = $region40
        $region39: #{tpu_custom_call.1} parent=31 // pred_region
          %v1058 = vunpack.c.l.bf16 %v307
          %v1059 = vunpack.c.l.bf16 %v308
          %v1060 = vunpack.c.l.bf16 %v309
          %v1061 = vunpack.c.l.bf16 %v310
          %v1062 = vunpack.c.l.bf16 %v311
          %v1063 = vunpack.c.l.bf16 %v312
          %v1064 = vunpack.c.l.bf16 %v313
          %v1065 = vunpack.c.l.bf16 %v314
          %v1066 = vunpack.c.l.bf16 %v315
          %v1067 = vunpack.c.l.bf16 %v316
          %v1068 = vunpack.c.l.bf16 %v317
          %v1069 = vunpack.c.l.bf16 %v318
          %v1070 = vunpack.c.l.bf16 %v319
          %v1071 = vunpack.c.l.bf16 %v320
          %v1072 = vunpack.c.l.bf16 %v321
          %v1073 = vunpack.c.l.bf16 %v322
          %v1074 = vld [vmem:[#allocation3] sm:$0xff]
          %v1075 = vld [vmem:[#allocation3 + $0x8] sm:$0xff]
          %v1076 = vld [vmem:[#allocation3 + $0x10] sm:$0xff]
          %v1077 = vld [vmem:[#allocation3 + $0x18] sm:$0xff]
          %v1078 = vld [vmem:[#allocation3 + $0x20] sm:$0xff]
          %v1079 = vld [vmem:[#allocation3 + $0x28] sm:$0xff]
          %v1080 = vld [vmem:[#allocation3 + $0x30] sm:$0xff]
          %v1081 = vld [vmem:[#allocation3 + $0x38] sm:$0xff]
          %v1082 = vld [vmem:[#allocation3 + $0x40] sm:$0xff]
          %v1083 = vld [vmem:[#allocation3 + $0x48] sm:$0xff]
          %v1084 = vld [vmem:[#allocation3 + $0x50] sm:$0xff]
          %v1085 = vld [vmem:[#allocation3 + $0x58] sm:$0xff]
          %v1086 = vld [vmem:[#allocation3 + $0x60] sm:$0xff]
          %v1087 = vld [vmem:[#allocation3 + $0x68] sm:$0xff]
          %v1088 = vld [vmem:[#allocation3 + $0x70] sm:$0xff]
          %v1089 = vld [vmem:[#allocation3 + $0x78] sm:$0xff]
          %v1090 = vmul.f32 %v1058, %v1074
          %v1091 = vmul.f32 %v1059, %v1075
          %v1092 = vmul.f32 %v1060, %v1076
          %v1093 = vmul.f32 %v1061, %v1077
          %v1094 = vmul.f32 %v1062, %v1078
          %v1095 = vmul.f32 %v1063, %v1079
          %v1096 = vmul.f32 %v1064, %v1080
          %v1097 = vmul.f32 %v1065, %v1081
          %v1098 = vmul.f32 %v1066, %v1082
          %v1099 = vmul.f32 %v1067, %v1083
          %v1100 = vmul.f32 %v1068, %v1084
          %v1101 = vmul.f32 %v1069, %v1085
          %v1102 = vmul.f32 %v1070, %v1086
          %v1103 = vmul.f32 %v1071, %v1087
          %v1104 = vmul.f32 %v1072, %v1088
          %v1105 = vmul.f32 %v1073, %v1089
          %v1106 = vsel %vm387, %v1090, 0.0
          %1107 = vadd.xlane.f32.xlu0 %v1106
          %v1108 = vpop.xlane.xlu0 %1107
          %v1109 = vsel %vm387, %v1091, 0.0
          %1110 = vadd.xlane.f32.xlu0 %v1109
          %v1111 = vpop.xlane.xlu0 %1110
          %v1112 = vsel %vm387, %v1092, 0.0
          %1113 = vadd.xlane.f32.xlu0 %v1112
          %v1114 = vpop.xlane.xlu0 %1113
          %v1115 = vsel %vm387, %v1093, 0.0
          %1116 = vadd.xlane.f32.xlu0 %v1115
          %v1117 = vpop.xlane.xlu0 %1116
          %v1118 = vsel %vm387, %v1094, 0.0
          %1119 = vadd.xlane.f32.xlu0 %v1118
          %v1120 = vpop.xlane.xlu0 %1119
          %v1121 = vsel %vm387, %v1095, 0.0
          %1122 = vadd.xlane.f32.xlu0 %v1121
          %v1123 = vpop.xlane.xlu0 %1122
          %v1124 = vsel %vm387, %v1096, 0.0
          %1125 = vadd.xlane.f32.xlu0 %v1124
          %v1126 = vpop.xlane.xlu0 %1125
          %v1127 = vsel %vm387, %v1097, 0.0
          %1128 = vadd.xlane.f32.xlu0 %v1127
          %v1129 = vpop.xlane.xlu0 %1128
          %v1130 = vsel %vm387, %v1098, 0.0
          %1131 = vadd.xlane.f32.xlu0 %v1130
          %v1132 = vpop.xlane.xlu0 %1131
          %v1133 = vsel %vm387, %v1099, 0.0
          %1134 = vadd.xlane.f32.xlu0 %v1133
          %v1135 = vpop.xlane.xlu0 %1134
          %v1136 = vsel %vm387, %v1100, 0.0
          %1137 = vadd.xlane.f32.xlu0 %v1136
          %v1138 = vpop.xlane.xlu0 %1137
          %v1139 = vsel %vm387, %v1101, 0.0
          %1140 = vadd.xlane.f32.xlu0 %v1139
          %v1141 = vpop.xlane.xlu0 %1140
          %v1142 = vsel %vm387, %v1102, 0.0
          %1143 = vadd.xlane.f32.xlu0 %v1142
          %v1144 = vpop.xlane.xlu0 %1143
          %v1145 = vsel %vm387, %v1103, 0.0
          %1146 = vadd.xlane.f32.xlu0 %v1145
          %v1147 = vpop.xlane.xlu0 %1146
          %v1148 = vsel %vm387, %v1104, 0.0
          %1149 = vadd.xlane.f32.xlu0 %v1148
          %v1150 = vpop.xlane.xlu0 %1149
          %v1151 = vsel %vm387, %v1105, 0.0
          %1152 = vadd.xlane.f32.xlu0 %v1151
          %v1153 = vpop.xlane.xlu0 %1152
          %v1154 = vld [vmem:[#allocation2] sm:$0x3]
          %v1155 = vmul.f32 %v1108, 0.015625
          %v1156 = vmul.f32 %v1111, 0.015625
          %v1157 = vmul.f32 %v1114, 0.015625
          %v1158 = vmul.f32 %v1117, 0.015625
          %v1159 = vmul.f32 %v1120, 0.015625
          %v1160 = vmul.f32 %v1123, 0.015625
          %v1161 = vmul.f32 %v1126, 0.015625
          %v1162 = vmul.f32 %v1129, 0.015625
          %v1163 = vmul.f32 %v1132, 0.015625
          %v1164 = vmul.f32 %v1135, 0.015625
          %v1165 = vmul.f32 %v1138, 0.015625
          %v1166 = vmul.f32 %v1141, 0.015625
          %v1167 = vmul.f32 %v1144, 0.015625
          %v1168 = vmul.f32 %v1147, 0.015625
          %v1169 = vmul.f32 %v1150, 0.015625
          %v1170 = vmul.f32 %v1153, 0.015625
          %v1187 = vlaneseq
          %v1188 = vshrl.u32 %v1187, 7
          %v1189 = vsub.s32 %v737, %v1188
          %v1190 = vrot.slane %v1155, %v1189
          %v1191 = vlaneseq
          %v1192 = vshrl.u32 %v1191, 7
          %v1193 = vsub.s32 %v742, %v1192
          %v1194 = vrot.slane %v1156, %v1193
          %v1195 = vsel %vm747, %v1194, %v1190
          %v1196 = vlaneseq
          %v1197 = vshrl.u32 %v1196, 7
          %v1198 = vsub.s32 %v749, %v1197
          %v1199 = vrot.slane %v1157, %v1198
          %v1200 = vsel %vm754, %v1199, %v1195
          %v1201 = vlaneseq
          %v1202 = vshrl.u32 %v1201, 7
          %v1203 = vsub.s32 %v756, %v1202
          %v1204 = vrot.slane %v1158, %v1203
          %v1205 = vsel %vm761, %v1204, %v1200
          %v1206 = vlaneseq
          %v1207 = vshrl.u32 %v1206, 7
          %v1208 = vsub.s32 %v763, %v1207
          %v1209 = vrot.slane %v1159, %v1208
          %v1210 = vsel %vm768, %v1209, %v1205
          %v1211 = vlaneseq
          %v1212 = vshrl.u32 %v1211, 7
          %v1213 = vsub.s32 %v770, %v1212
          %v1214 = vrot.slane %v1160, %v1213
          %v1215 = vsel %vm775, %v1214, %v1210
          %v1216 = vlaneseq
          %v1217 = vshrl.u32 %v1216, 7
          %v1218 = vsub.s32 %v777, %v1217
          %v1219 = vrot.slane %v1161, %v1218
          %v1220 = vsel %vm782, %v1219, %v1215
          %v1221 = vlaneseq
          %v1222 = vshrl.u32 %v1221, 7
          %v1223 = vsub.s32 %v784, %v1222
          %v1224 = vrot.slane %v1162, %v1223
          %v1225 = vsel %vm789, %v1224, %v1220
          %v1226 = vlaneseq
          %v1227 = vshrl.u32 %v1226, 7
          %v1228 = vsub.s32 %v737, %v1227
          %v1229 = vrot.slane %v1163, %v1228
          %v1230 = vlaneseq
          %v1231 = vshrl.u32 %v1230, 7
          %v1232 = vsub.s32 %v742, %v1231
          %v1233 = vrot.slane %v1164, %v1232
          %v1234 = vsel %vm747, %v1233, %v1229
          %v1235 = vlaneseq
          %v1236 = vshrl.u32 %v1235, 7
          %v1237 = vsub.s32 %v749, %v1236
          %v1238 = vrot.slane %v1165, %v1237
          %v1239 = vsel %vm754, %v1238, %v1234
          %v1240 = vlaneseq
          %v1241 = vshrl.u32 %v1240, 7
          %v1242 = vsub.s32 %v756, %v1241
          %v1243 = vrot.slane %v1166, %v1242
          %v1244 = vsel %vm761, %v1243, %v1239
          %v1245 = vlaneseq
          %v1246 = vshrl.u32 %v1245, 7
          %v1247 = vsub.s32 %v763, %v1246
          %v1248 = vrot.slane %v1167, %v1247
          %v1249 = vsel %vm768, %v1248, %v1244
          %v1250 = vlaneseq
          %v1251 = vshrl.u32 %v1250, 7
          %v1252 = vsub.s32 %v770, %v1251
          %v1253 = vrot.slane %v1168, %v1252
          %v1254 = vsel %vm775, %v1253, %v1249
          %v1255 = vlaneseq
          %v1256 = vshrl.u32 %v1255, 7
          %v1257 = vsub.s32 %v777, %v1256
          %v1258 = vrot.slane %v1169, %v1257
          %v1259 = vsel %vm782, %v1258, %v1254
          %v1260 = vlaneseq
          %v1261 = vshrl.u32 %v1260, 7
          %v1262 = vsub.s32 %v784, %v1261
          %v1263 = vrot.slane %v1170, %v1262
          %v1264 = vsel %vm789, %v1263, %v1259
          %v1265 = vsel %vm830, %v1264, %v1225
          %v1267 = vsub.f32 %v1154, %v1265
          %1268 = vst.msk [vmem:[%s249] sm:$0x3] %vm834, %v1267
        $region40: #{tpu_custom_call.1} parent=31 // pred_fallthru
          _
        %s1269 = sand.u32 %s130, 1
        %s1270 = scalar_lea.sflag [#allocation5], %s1269
        %s1271 = sand.u32 %s130, 1
        %s1272 = smul.addr %s1271, 2
        %s1273 = scalar_lea.vmem [#allocation4], %s1272
        // Predicated region
        $region41: #{tpu_custom_call.1} parent=31 // pred_check
          %p1274 = pneg %p140
        $region42: #{tpu_custom_call.1} parent=31 // pred_check_branch
          %1276 = sbr.rel (%p1274) target = $region44
        $region43: #{tpu_custom_call.1} parent=31 // pred_region
          %s1278 = ssub.s32 32, 32
          %1279 = vsyncadd %s1270, %s1278
          %s1280 = sadd.s32 %s23, %s22
          %s1281 = smul.addr %s1280, 32
          %s1282 = scalar_lea.hbm %s3, %s1281
          %s1284 = sshll.u32 %s1273, 4
          %s1285 = int_to_ptr.vmem [resolvable:$true] %s1284
          %1287 = dma.vmem_to_hbm [thread:$0]  %s1285, 32, %s1282, %s1270
        $region44: #{tpu_custom_call.1} parent=31 // pred_fallthru
          _
      $region32: #{tpu_custom_call.1} parent=5 // pred_fallthru
        _
      %p1288 = scmp.le.s32.totalorder 2, %s12
      // Predicated region
      $region45: #{tpu_custom_call.1} parent=5 // pred_check
        %p1289 = pneg %p1288
      $region46: #{tpu_custom_call.1} parent=5 // pred_check_branch
        %1291 = sbr.rel (%p1289) target = $region48
      $region47: #{tpu_custom_call.1} parent=5 // pred_region
        %s1292 = ssub.s32 %s12, 2
        // Predicated region
        $region49: #{tpu_custom_call.1} parent=47 // pred_check
          %p1293 = pneg %p146
        $region50: #{tpu_custom_call.1} parent=47 // pred_check_branch
          %1295 = sbr.rel (%p1293) target = $region52
        $region51: #{tpu_custom_call.1} parent=47 // pred_region
          %s1296 = sand.u32 %s131, 1
          %s1297 = scalar_lea.sflag [#allocation5], %s1296
          %s1298 = sand.u32 %s131, 1
          %s1299 = smul.addr %s1298, 2
          %s1300 = scalar_lea.vmem [#allocation4], %s1299
          %1301 = dma.done %s1297, 32
        $region52: #{tpu_custom_call.1} parent=47 // pred_fallthru
          _
      $region48: #{tpu_custom_call.1} parent=5 // pred_fallthru
        _
    $region6: #{tpu_custom_call.1} parent=1 // loop_footer
      %s16 = sadd.s32 1, %s12
    $region7: #{tpu_custom_call.1} parent=1 // loop_footer_branch
      %11 = sbr.rel target = $region3
    $region8: #{tpu_custom_call.1} parent=1 // loop_exit
      _
    %1302 = vsyncpa [#allocation5], 1
    %s1303 = scalar_lea.sflag [#allocation5], 1
    %1304 = vsyncpa %s1303, 1

</llo_original>
